<compile_context>
chip_gen: v6e
topology: v6e:2x2x1
jax: 0.10.0
libtpu: 0.0.40
codegen_flags: <defaults>
</compile_context>

<pallas_src>
import functools

import jax
import jax.numpy as jnp
from jax.experimental import pallas as pl
from jax.experimental.pallas import tpu as pltpu

_EPS = 1e-8  # F.cosine_similarity default eps


def _cosine_kernel(a_ref, b_ref, o_ref, *, n_rows, ragged):
    # a_ref, b_ref: (rt, d) VMEM tiles; o_ref: (1, rt) lane-dense output row.
    rt, d = a_ref.shape
    a = a_ref[...].astype(jnp.float32)
    b = b_ref[...].astype(jnp.float32)
    ones = jnp.ones((d, 1), jnp.float32)
    # Cross-lane reductions on the MXU (f32 products, f32 accumulation) instead
    # of lane-rotate trees on the XLU.
    dot = jnp.dot(a * b, ones, preferred_element_type=jnp.float32)   # (rt, 1)
    sa = jnp.dot(a * a, ones, preferred_element_type=jnp.float32)    # (rt, 1)
    sb = jnp.dot(b * b, ones, preferred_element_type=jnp.float32)    # (rt, 1)
    # Exactly dot / max(||a||*||b||, eps); rsqrt runs on the otherwise-idle EUP.
    inv = jax.lax.rsqrt(jnp.maximum(sa * sb, _EPS * _EPS))
    res = (dot * inv).reshape(1, rt)                                  # lane-dense
    if ragged:
        # Last partial block reads unspecified data past row n-1; zero its lanes.
        rows = pl.program_id(0) * rt + jax.lax.broadcasted_iota(
            jnp.int32, (1, rt), 1)
        res = jnp.where(rows < n_rows, res, 0.0)
    o_ref[...] = res


def _round_up(x, m):
    return (x + m - 1) // m * m


def _vmem_capacity_bytes():
    try:
        return int(pltpu.get_tpu_info().vmem_capacity_bytes)
    except Exception:
        return 64 * 1024 * 1024  # v7x per-TensorCore capacity: safe minimum


def _choose_tiling(n, d, dtype):
    """Pick (row_tile, vmem_limit_bytes), temp-aware.

    Budgets everything simultaneously live in VMEM:
      * 2 inputs x 2 pipeline buffers in the input dtype,
      * the f32 intermediates the compiler materializes (3 elementwise
        products, plus 2 casts when the inputs are not already f32),
      * ~2 KiB/row for the lane-padded (rt, 1) matmul-output columns / output.
    """
    itemsize = jnp.dtype(dtype).itemsize
    vmem_cap = _vmem_capacity_bytes()
    n_f32_temps = 3 + (0 if jnp.dtype(dtype) == jnp.dtype(jnp.float32) else 2)
    d_pad = _round_up(d, 128)  # lane padding is what actually lands in VMEM
    per_row = d_pad * (4 * itemsize + 4 * n_f32_temps) + 2048
    budget = min(vmem_cap // 2, 40 * 1024 * 1024)  # v7x: 32 MiB, v5e/v6e: 40 MiB
    rt = max(128, min(4096, (budget // per_row) // 128 * 128))

    n_pad = _round_up(n, 128)
    rt = min(rt, n_pad)
    # Prefer an even number (>=2) of grid steps: the single "parallel" axis is
    # sharded across v7x's two TensorCores, so an odd small tile count leaves
    # one core with up to ~50% more work.  Only when 128-row granularity allows.
    num_tiles = -(-n // rt)
    if num_tiles < 2 or num_tiles % 2:
        target = max(2, _round_up(num_tiles, 2))
        rt_even = max(128, _round_up(-(-n_pad // target), 128))
        if (-(-n // rt_even)) % 2 == 0:
            rt = rt_even

    vmem_limit = min(int(vmem_cap * 0.85), 100 * 1024 * 1024)
    return rt, vmem_limit


def relation_network_forward(a, b, *, row_tile=None):
    """Pallas implementation of RelationNetwork.forward (cosine similarity).

    a, b: (B1, B2, ...) arrays of any float dtype; flattened to (B1*B2, D).
    Returns (B1*B2,) float32 cosine similarities.
    """
    assert a.shape == b.shape and a.ndim >= 2
    n = a.shape[0] * a.shape[1]
    a2 = a.reshape(n, -1)
    b2 = b.reshape(n, -1)
    d = a2.shape[1]
    # TODO(synk): for very large D (>= ~16K f32) the (128, D) double-buffered
    # tiles exceed VMEM; a feature-axis ("arbitrary") grid dim with scratch
    # accumulators would be needed.  Text-feature D is far below that.

    if row_tile is None:
        rt, vmem_limit = _choose_tiling(n, d, a2.dtype)
    else:
        rt = row_tile
        vmem_limit = min(int(_vmem_capacity_bytes() * 0.85), 100 * 1024 * 1024)
    num_tiles = -(-n // rt)
    ragged = (n % rt) != 0

    kernel = functools.partial(_cosine_kernel, n_rows=n, ragged=ragged)
    out = pl.pallas_call(
        kernel,
        out_shape=jax.ShapeDtypeStruct((num_tiles, rt), jnp.float32),
        grid_spec=pltpu.PrefetchScalarGridSpec(
            num_scalar_prefetch=0,
            grid=(num_tiles,),
            in_specs=[
                pl.BlockSpec((rt, d), lambda i: (i, 0)),
                pl.BlockSpec((rt, d), lambda i: (i, 0)),
            ],
            out_specs=pl.BlockSpec((1, rt), lambda i: (i, 0)),
        ),
        compiler_params=pltpu.CompilerParams(
            dimension_semantics=("parallel",),
            vmem_limit_bytes=vmem_limit,
        ),
    )(a2, b2)
    return out.reshape(num_tiles * rt)[:n]


def init_relation_network_params(key, input_size, hidden_size):
    """Deterministic init of the (dead-code) fc1/fc2 parameters.

    nn.Linear shapes: fc1.weight (hidden, input), fc1.bias (hidden,),
    fc2.weight (1, hidden), fc2.bias (1,).  These are NOT used by the live
    forward path (it returns the cosine similarity before touching them);
    they exist only for shape fidelity with the module's __init__.
    """
    # TODO(synk): fc1/relu/fc2/sigmoid are unreachable in the PyTorch forward
    # (code after `return cosine`), so no Pallas kernel is emitted for them.
    k1, k2, k3, k4 = jax.random.split(key, 4)
    lim1 = 1.0 / jnp.sqrt(input_size)
    lim2 = 1.0 / jnp.sqrt(hidden_size)
    return {
        "fc1_w": jax.random.uniform(k1, (hidden_size, input_size),
                                    minval=-lim1, maxval=lim1),
        "fc1_b": jax.random.uniform(k2, (hidden_size,),
                                    minval=-lim1, maxval=lim1),
        "fc2_w": jax.random.uniform(k3, (1, hidden_size),
                                    minval=-lim2, maxval=lim2),
        "fc2_b": jax.random.uniform(k4, (1,),
                                    minval=-lim2, maxval=lim2),
    }


def _reference(a, b):
    n = a.shape[0] * a.shape[1]
    a2 = a.reshape(n, -1).astype(jnp.float32)
    b2 = b.reshape(n, -1).astype(jnp.float32)
    return jnp.sum(a2 * b2, axis=1) / jnp.maximum(
        jnp.linalg.norm(a2, axis=1) * jnp.linalg.norm(b2, axis=1), _EPS)


if __name__ == "__main__":
    key = jax.random.PRNGKey(0)
    ka, kb, kc, kd, kp = jax.random.split(key, 5)

    # Small shapes consistent with the module: a, b are (B1, B2, D),
    # flattened to (B1*B2, D) inside the forward.
    B1, B2, D = 2, 4, 128
    hidden = 32
    a = jax.random.normal(ka, (B1, B2, D), dtype=jnp.float32)
    b = jax.random.normal(kb, (B1, B2, D), dtype=jnp.float32)

    # Dead-code fc layers: input_size = 2*D after cat((a, b), 1).
    _params = init_relation_network_params(kp, 2 * D, hidden)

    out = jax.block_until_ready(relation_network_forward(a, b))
    ref = _reference(a, b)
    assert out.shape == (B1 * B2,)
    assert jnp.allclose(out, ref, atol=1e-4, rtol=1e-4)

    # Second check: multi-tile grid, ragged tail handled in-kernel (no host-side
    # padding), D not a lane multiple (160 -> 256 lanes in VMEM).
    B1b, B2b, Db = 3, 100, 160   # n = 300 rows -> 2 grid steps, partial last block
    a_big = jax.random.normal(kc, (B1b, B2b, Db), dtype=jnp.float32)
    b_big = jax.random.normal(kd, (B1b, B2b, Db), dtype=jnp.float32)
    out_big = jax.block_until_ready(relation_network_forward(a_big, b_big))
    assert out_big.shape == (B1b * B2b,)
    assert jnp.allclose(out_big, _reference(a_big, b_big), atol=1e-4, rtol=1e-4)

    print("KERNEL_OK")
</pallas_src>

<mosaic_0001>
module attributes {stable_mosaic.version = 11 : i64} {
  func.func @_cosine_kernel(%arg0: i32, %arg1: memref<128x128xf32, #tpu.memory_space<vmem>>, %arg2: memref<128x128xf32, #tpu.memory_space<vmem>>, %arg3: memref<1x128xf32, #tpu.memory_space<vmem>>) attributes {dimension_semantics = [#tpu.dimension_semantics<parallel>], iteration_bounds = array<i64: 1>, scalar_prefetch = 0 : i64, scratch_operands = 0 : i64, tpu.core_type = #tpu.core_type<tc>, window_params = [{transform_indices = @transform_0, window_bounds = array<i64: 128, 128>}, {transform_indices = @transform_1, window_bounds = array<i64: 128, 128>}, {transform_indices = @transform_2, window_bounds = array<i64: 1, 128>}]} {
    %c0 = arith.constant 0 : index
    %c0_0 = arith.constant 0 : index
    %0 = vector.load %arg1[%c0, %c0_0] : memref<128x128xf32, #tpu.memory_space<vmem>>, vector<128x128xf32>
    %c0_1 = arith.constant 0 : index
    %c0_2 = arith.constant 0 : index
    %1 = vector.load %arg2[%c0_1, %c0_2] : memref<128x128xf32, #tpu.memory_space<vmem>>, vector<128x128xf32>
    %cst = arith.constant 1.000000e+00 : f32
    %2 = vector.broadcast %cst : f32 to vector<128x1xf32>
    %3 = arith.mulf %0, %1 : vector<128x128xf32>
    %cst_3 = arith.constant dense<0.000000e+00> : vector<128x1xf32>
    %4 = tpu.matmul %3, %2, %cst_3 {dimension_numbers = #tpu.dot_dimension_numbers<[1], [0], [0], [1], [0, 0, 1, 1], [], []>} : vector<128x128xf32>, vector<128x1xf32>, vector<128x1xf32> -> vector<128x1xf32>
    %5 = arith.mulf %0, %0 : vector<128x128xf32>
    %cst_4 = arith.constant dense<0.000000e+00> : vector<128x1xf32>
    %6 = tpu.matmul %5, %2, %cst_4 {dimension_numbers = #tpu.dot_dimension_numbers<[1], [0], [0], [1], [0, 0, 1, 1], [], []>} : vector<128x128xf32>, vector<128x1xf32>, vector<128x1xf32> -> vector<128x1xf32>
    %7 = arith.mulf %1, %1 : vector<128x128xf32>
    %cst_5 = arith.constant dense<0.000000e+00> : vector<128x1xf32>
    %8 = tpu.matmul %7, %2, %cst_5 {dimension_numbers = #tpu.dot_dimension_numbers<[1], [0], [0], [1], [0, 0, 1, 1], [], []>} : vector<128x128xf32>, vector<128x1xf32>, vector<128x1xf32> -> vector<128x1xf32>
    %9 = arith.mulf %6, %8 : vector<128x1xf32>
    %cst_6 = arith.constant 1.000000e-16 : f32
    %10 = vector.broadcast %cst_6 : f32 to vector<128x1xf32>
    %11 = arith.maximumf %9, %10 : vector<128x1xf32>
    %12 = math.rsqrt %11 : vector<128x1xf32>
    %13 = arith.mulf %4, %12 : vector<128x1xf32>
    %14 = vector.shape_cast %13 : vector<128x1xf32> to vector<1x128xf32>
    %c128_i32 = arith.constant 128 : i32
    %15 = arith.muli %arg0, %c128_i32 : i32
    %16 = tpu.iota {dimensions = array<i32: 1>} : vector<1x128xi32>
    %17 = vector.broadcast %15 : i32 to vector<1x128xi32>
    %18 = arith.addi %17, %16 : vector<1x128xi32>
    %c8_i32 = arith.constant 8 : i32
    %19 = vector.broadcast %c8_i32 : i32 to vector<1x128xi32>
    %20 = arith.cmpi slt, %18, %19 : vector<1x128xi32>
    %cst_7 = arith.constant 0.000000e+00 : f32
    %21 = vector.broadcast %cst_7 : f32 to vector<1x128xf32>
    %22 = arith.select %20, %14, %21 : vector<1x128xi1>, vector<1x128xf32>
    %c0_8 = arith.constant 0 : index
    %c0_9 = arith.constant 0 : index
    %23 = vector.load %arg3[%c0_8, %c0_9] : memref<1x128xf32, #tpu.memory_space<vmem>>, vector<1x128xf32>
    tpu.vector_store %arg3[%c0_8, %c0_9], %22 {strides = array<i32>} : memref<1x128xf32, #tpu.memory_space<vmem>>, vector<1x128xf32>,
    return
  }
  func.func @transform_0(%arg0: i32) -> (i32, i32) {
    %c0_i32 = arith.constant 0 : i32
    %c0_i32_0 = arith.constant 0 : i32
    return %arg0, %c0_i32 : i32, i32
  }
  func.func @transform_1(%arg0: i32) -> (i32, i32) {
    %c0_i32 = arith.constant 0 : i32
    %c0_i32_0 = arith.constant 0 : i32
    return %arg0, %c0_i32 : i32, i32
  }
  func.func @transform_2(%arg0: i32) -> (i32, i32) {
    %c0_i32 = arith.constant 0 : i32
    %c0_i32_0 = arith.constant 0 : i32
    return %arg0, %c0_i32 : i32, i32
  }
}

</mosaic_0001>

<llo_original>
// kernel: tpu_custom_call.1
$region0: #{tpu_custom_call.1}
  #allocation0 [shape = 'u32[]', space=smem, size = 0x4, offset = 0x4, fixed_abs, tag = 'smem constant byte address 0x4 - core index']
  #allocation1 [shape = 'u32[144,128]{1,0:T(1,128)}', space=vmem, size = 0x12000, scoped, tag = 'internal scratch']
  %s0 = inlined_call_operand.hbm [shape: f32[8,128], index: 0, kind: input, shape index: {}]
  %s1 = inlined_call_operand.hbm [shape: f32[8,128], index: 1, kind: input, shape index: {}]
  %s2 = inlined_call_operand.hbm [shape: f32[1,128], index: 2, kind: output, shape index: {}]
  %s3 = sld [smem:[#allocation0]]
  $region26: #{tpu_custom_call.1} parent=0
    _
  %s5 = ssub.s32 1, %s3
  %s6 = scalar_select 0, %s5, %s3
  $region1: #{tpu_custom_call.1} parent=0
    #allocation2 [shape = 'u8[65536]{0}', space=vmem, size = 0x10000, scoped, tag = 'input window, operand 0, single buffered']
    #allocation3 [shape = 's32[1]{0}', space=sflag, size = 0x4, scoped, tag = 'scoped memory for tpu_custom_call.1']
    #allocation4 [shape = 's32[1]{0}', space=sflag, size = 0x4, scoped, tag = 'scoped memory for tpu_custom_call.1']
    #allocation5 [shape = 'u8[65536]{0}', space=vmem, size = 0x10000, scoped, tag = 'input window, operand 1, single buffered']
    #allocation6 [shape = 's32[1]{0}', space=sflag, size = 0x4, scoped, tag = 'scoped memory for tpu_custom_call.1']
    #allocation7 [shape = 'u8[512]{0}', space=vmem, size = 0x400, scoped, tag = 'output window, operand 0, single buffered']
    %7 = vsyncpa [#allocation3], 0
    %8 = vsyncpa [#allocation6], 0
    %9 = vsyncpa [#allocation4], 0
    // Predicated region
    $region2: #{tpu_custom_call.1} parent=1 // pred_check
      _
    $region3: #{tpu_custom_call.1} parent=1 // pred_check_branch
      %11 = sbr.rel (0) target = $region5
    $region4: #{tpu_custom_call.1} parent=1 // pred_region
      %s13 = ssub.s32 2048, 128
      %14 = vsyncadd [#allocation3], %s13
      %s15 = sshll.u32 [#allocation2], 4
      %s16 = int_to_ptr.vmem [resolvable:$true] %s15
      %21 = dma.hbm_to_vmem [thread:$0]  %s0, 128, %s16, [#allocation3], 128, 128, 8
    $region5: #{tpu_custom_call.1} parent=1 // pred_fallthru
      _
    // Predicated region
    $region6: #{tpu_custom_call.1} parent=1 // pred_check
      _
    $region7: #{tpu_custom_call.1} parent=1 // pred_check_branch
      %23 = sbr.rel (0) target = $region9
    $region8: #{tpu_custom_call.1} parent=1 // pred_region
      %s25 = ssub.s32 2048, 128
      %26 = vsyncadd [#allocation6], %s25
      %s27 = sshll.u32 [#allocation5], 4
      %s28 = int_to_ptr.vmem [resolvable:$true] %s27
      %33 = dma.hbm_to_vmem [thread:$0]  %s1, 128, %s28, [#allocation6], 128, 128, 8
    $region9: #{tpu_custom_call.1} parent=1 // pred_fallthru
      _
    // Predicated region
    $region10: #{tpu_custom_call.1} parent=1 // pred_check
      _
    $region11: #{tpu_custom_call.1} parent=1 // pred_check_branch
      %35 = sbr.rel (0) target = $region13
    $region12: #{tpu_custom_call.1} parent=1 // pred_region
      %36 = dma.done [#allocation3], 2048
    $region13: #{tpu_custom_call.1} parent=1 // pred_fallthru
      _
    // Predicated region
    $region14: #{tpu_custom_call.1} parent=1 // pred_check
      _
    $region15: #{tpu_custom_call.1} parent=1 // pred_check_branch
      %38 = sbr.rel (0) target = $region17
    $region16: #{tpu_custom_call.1} parent=1 // pred_region
      %39 = dma.done [#allocation6], 2048
    $region17: #{tpu_custom_call.1} parent=1 // pred_fallthru
      _
    %v40 = vld [vmem:[#allocation2] sm:$0xff]
    %v41 = vld [vmem:[#allocation2 + $0x8] sm:$0xff]
    %v42 = vld [vmem:[#allocation2 + $0x10] sm:$0xff]
    %v43 = vld [vmem:[#allocation2 + $0x18] sm:$0xff]
    %v44 = vld [vmem:[#allocation2 + $0x20] sm:$0xff]
    %v45 = vld [vmem:[#allocation2 + $0x28] sm:$0xff]
    %v46 = vld [vmem:[#allocation2 + $0x30] sm:$0xff]
    %v47 = vld [vmem:[#allocation2 + $0x38] sm:$0xff]
    %v48 = vld [vmem:[#allocation2 + $0x40] sm:$0xff]
    %v49 = vld [vmem:[#allocation2 + $0x48] sm:$0xff]
    %v50 = vld [vmem:[#allocation2 + $0x50] sm:$0xff]
    %v51 = vld [vmem:[#allocation2 + $0x58] sm:$0xff]
    %v52 = vld [vmem:[#allocation2 + $0x60] sm:$0xff]
    %v53 = vld [vmem:[#allocation2 + $0x68] sm:$0xff]
    %v54 = vld [vmem:[#allocation2 + $0x70] sm:$0xff]
    %v55 = vld [vmem:[#allocation2 + $0x78] sm:$0xff]
    %v56 = vld [vmem:[#allocation5] sm:$0xff]
    %v57 = vld [vmem:[#allocation5 + $0x8] sm:$0xff]
    %v58 = vld [vmem:[#allocation5 + $0x10] sm:$0xff]
    %v59 = vld [vmem:[#allocation5 + $0x18] sm:$0xff]
    %v60 = vld [vmem:[#allocation5 + $0x20] sm:$0xff]
    %v61 = vld [vmem:[#allocation5 + $0x28] sm:$0xff]
    %v62 = vld [vmem:[#allocation5 + $0x30] sm:$0xff]
    %v63 = vld [vmem:[#allocation5 + $0x38] sm:$0xff]
    %v64 = vld [vmem:[#allocation5 + $0x40] sm:$0xff]
    %v65 = vld [vmem:[#allocation5 + $0x48] sm:$0xff]
    %v66 = vld [vmem:[#allocation5 + $0x50] sm:$0xff]
    %v67 = vld [vmem:[#allocation5 + $0x58] sm:$0xff]
    %v68 = vld [vmem:[#allocation5 + $0x60] sm:$0xff]
    %v69 = vld [vmem:[#allocation5 + $0x68] sm:$0xff]
    %v70 = vld [vmem:[#allocation5 + $0x70] sm:$0xff]
    %v71 = vld [vmem:[#allocation5 + $0x78] sm:$0xff]
    %v72 = vmul.f32 %v40, %v56
    %v73 = vmul.f32 %v41, %v57
    %v74 = vmul.f32 %v42, %v58
    %v75 = vmul.f32 %v43, %v59
    %v76 = vmul.f32 %v44, %v60
    %v77 = vmul.f32 %v45, %v61
    %v78 = vmul.f32 %v46, %v62
    %v79 = vmul.f32 %v47, %v63
    %v80 = vmul.f32 %v48, %v64
    %v81 = vmul.f32 %v49, %v65
    %v82 = vmul.f32 %v50, %v66
    %v83 = vmul.f32 %v51, %v67
    %v84 = vmul.f32 %v52, %v68
    %v85 = vmul.f32 %v53, %v69
    %v86 = vmul.f32 %v54, %v70
    %v87 = vmul.f32 %v55, %v71
    %88 = vmatprep.subr.mxu0 0.0
    %89 = vmatpush1.msra.mxu0 1.0
    %90 = vmatprep.subr.mxu0 0.0
    %91 = vmatpush1.msra.mxu0 1.0
    %92 = vmatprep.subr.mxu0 0.0
    %93 = vmatpush1.msra.mxu0 1.0
    %94 = vmatprep.subr.mxu0 0.0
    %95 = vmatpush1.msra.mxu0 1.0
    %96 = vmatprep.subr.mxu0 0.0
    %97 = vmatpush1.msra.mxu0 1.0
    %98 = vmatprep.subr.mxu0 0.0
    %99 = vmatpush1.msra.mxu0 1.0
    %100 = vmatprep.subr.mxu0 0.0
    %101 = vmatpush1.msra.mxu0 1.0
    %102 = vmatprep.subr.mxu0 0.0
    %103 = vmatpush1.msra.mxu0 1.0
    %104 = vmatprep.subr.mxu0 0.0
    %105 = vmatpush1.msra.mxu0 1.0
    %106 = vmatprep.subr.mxu0 0.0
    %107 = vmatpush1.msra.mxu0 1.0
    %108 = vmatprep.subr.mxu0 0.0
    %109 = vmatpush1.msra.mxu0 1.0
    %110 = vmatprep.subr.mxu0 0.0
    %111 = vmatpush1.msra.mxu0 1.0
    %112 = vmatprep.subr.mxu0 0.0
    %113 = vmatpush1.msra.mxu0 1.0
    %114 = vmatprep.subr.mxu0 0.0
    %115 = vmatpush1.msra.mxu0 1.0
    %116 = vmatprep.subr.mxu0 0.0
    %117 = vmatpush1.msra.mxu0 1.0
    %118 = vmatprep.subr.mxu0 0.0
    %119 = vmatpush1.msra.mxu0 1.0
    %120 = vmatprep.subr.mxu0 0.0
    %121 = vmatpush2.msra.mxu0 0.0
    %122 = vmatprep.subr.mxu0 0.0
    %123 = vmatpush2.msra.mxu0 0.0
    %124 = vmatprep.subr.mxu0 0.0
    %125 = vmatpush2.msra.mxu0 0.0
    %126 = vmatprep.subr.mxu0 0.0
    %127 = vmatpush2.msra.mxu0 0.0
    %128 = vmatprep.subr.mxu0 0.0
    %129 = vmatpush2.msra.mxu0 0.0
    %130 = vmatprep.subr.mxu0 0.0
    %131 = vmatpush2.msra.mxu0 0.0
    %132 = vmatprep.subr.mxu0 0.0
    %133 = vmatpush2.msra.mxu0 0.0
    %134 = vmatprep.subr.mxu0 0.0
    %135 = vmatpush2.msra.mxu0 0.0
    %136 = vmatprep.subr.mxu0 0.0
    %137 = vmatpush2.msra.mxu0 0.0
    %138 = vmatprep.subr.mxu0 0.0
    %139 = vmatpush2.msra.mxu0 0.0
    %140 = vmatprep.subr.mxu0 0.0
    %141 = vmatpush2.msra.mxu0 0.0
    %142 = vmatprep.subr.mxu0 0.0
    %143 = vmatpush2.msra.mxu0 0.0
    %144 = vmatprep.subr.mxu0 0.0
    %145 = vmatpush2.msra.mxu0 0.0
    %146 = vmatprep.subr.mxu0 0.0
    %147 = vmatpush2.msra.mxu0 0.0
    %148 = vmatprep.subr.mxu0 0.0
    %149 = vmatpush2.msra.mxu0 0.0
    %150 = vmatprep.subr.mxu0 0.0
    %151 = vmatpush2.msra.mxu0 0.0
    %152 = vmatprep.mubr.f32.mxu0 0.0
    %153 = vmatmul.mubr.f32.gmra.mxu0 %v72
    %v154 = vpop.f32.mrf.mxu0
    %v155 = vadd.f32 0.0, %v154
    %v156 = vpop.f32.mrf.mxu0
    %157 = vmatprep.mubr.f32.mxu0 0.0
    %158 = vmatmul.mubr.f32.gmra.mxu0 %v73
    %v159 = vpop.f32.mrf.mxu0
    %v160 = vadd.f32 0.0, %v159
    %v161 = vpop.f32.mrf.mxu0
    %162 = vmatprep.mubr.f32.mxu0 0.0
    %163 = vmatmul.mubr.f32.gmra.mxu0 %v74
    %v164 = vpop.f32.mrf.mxu0
    %v165 = vadd.f32 0.0, %v164
    %v166 = vpop.f32.mrf.mxu0
    %167 = vmatprep.mubr.f32.mxu0 0.0
    %168 = vmatmul.mubr.f32.gmra.mxu0 %v75
    %v169 = vpop.f32.mrf.mxu0
    %v170 = vadd.f32 0.0, %v169
    %v171 = vpop.f32.mrf.mxu0
    %172 = vmatprep.mubr.f32.mxu0 0.0
    %173 = vmatmul.mubr.f32.gmra.mxu0 %v76
    %v174 = vpop.f32.mrf.mxu0
    %v175 = vadd.f32 0.0, %v174
    %v176 = vpop.f32.mrf.mxu0
    %177 = vmatprep.mubr.f32.mxu0 0.0
    %178 = vmatmul.mubr.f32.gmra.mxu0 %v77
    %v179 = vpop.f32.mrf.mxu0
    %v180 = vadd.f32 0.0, %v179
    %v181 = vpop.f32.mrf.mxu0
    %182 = vmatprep.mubr.f32.mxu0 0.0
    %183 = vmatmul.mubr.f32.gmra.mxu0 %v78
    %v184 = vpop.f32.mrf.mxu0
    %v185 = vadd.f32 0.0, %v184
    %v186 = vpop.f32.mrf.mxu0
    %187 = vmatprep.mubr.f32.mxu0 0.0
    %188 = vmatmul.mubr.f32.gmra.mxu0 %v79
    %v189 = vpop.f32.mrf.mxu0
    %v190 = vadd.f32 0.0, %v189
    %v191 = vpop.f32.mrf.mxu0
    %192 = vmatprep.mubr.f32.mxu0 0.0
    %193 = vmatmul.mubr.f32.gmra.mxu0 %v80
    %v194 = vpop.f32.mrf.mxu0
    %v195 = vadd.f32 0.0, %v194
    %v196 = vpop.f32.mrf.mxu0
    %197 = vmatprep.mubr.f32.mxu0 0.0
    %198 = vmatmul.mubr.f32.gmra.mxu0 %v81
    %v199 = vpop.f32.mrf.mxu0
    %v200 = vadd.f32 0.0, %v199
    %v201 = vpop.f32.mrf.mxu0
    %202 = vmatprep.mubr.f32.mxu0 0.0
    %203 = vmatmul.mubr.f32.gmra.mxu0 %v82
    %v204 = vpop.f32.mrf.mxu0
    %v205 = vadd.f32 0.0, %v204
    %v206 = vpop.f32.mrf.mxu0
    %207 = vmatprep.mubr.f32.mxu0 0.0
    %208 = vmatmul.mubr.f32.gmra.mxu0 %v83
    %v209 = vpop.f32.mrf.mxu0
    %v210 = vadd.f32 0.0, %v209
    %v211 = vpop.f32.mrf.mxu0
    %212 = vmatprep.mubr.f32.mxu0 0.0
    %213 = vmatmul.mubr.f32.gmra.mxu0 %v84
    %v214 = vpop.f32.mrf.mxu0
    %v215 = vadd.f32 0.0, %v214
    %v216 = vpop.f32.mrf.mxu0
    %217 = vmatprep.mubr.f32.mxu0 0.0
    %218 = vmatmul.mubr.f32.gmra.mxu0 %v85
    %v219 = vpop.f32.mrf.mxu0
    %v220 = vadd.f32 0.0, %v219
    %v221 = vpop.f32.mrf.mxu0
    %222 = vmatprep.mubr.f32.mxu0 0.0
    %223 = vmatmul.mubr.f32.gmra.mxu0 %v86
    %v224 = vpop.f32.mrf.mxu0
    %v225 = vadd.f32 0.0, %v224
    %v226 = vpop.f32.mrf.mxu0
    %227 = vmatprep.mubr.f32.mxu0 0.0
    %228 = vmatmul.mubr.f32.gmra.mxu0 %v87
    %v229 = vpop.f32.mrf.mxu0
    %v230 = vadd.f32 0.0, %v229
    %v231 = vpop.f32.mrf.mxu0
    %232 = vdwg.mxu0
    %v233 = vmul.f32 %v40, %v40
    %v234 = vmul.f32 %v41, %v41
    %v235 = vmul.f32 %v42, %v42
    %v236 = vmul.f32 %v43, %v43
    %v237 = vmul.f32 %v44, %v44
    %v238 = vmul.f32 %v45, %v45
    %v239 = vmul.f32 %v46, %v46
    %v240 = vmul.f32 %v47, %v47
    %v241 = vmul.f32 %v48, %v48
    %v242 = vmul.f32 %v49, %v49
    %v243 = vmul.f32 %v50, %v50
    %v244 = vmul.f32 %v51, %v51
    %v245 = vmul.f32 %v52, %v52
    %v246 = vmul.f32 %v53, %v53
    %v247 = vmul.f32 %v54, %v54
    %v248 = vmul.f32 %v55, %v55
    %249 = vmatprep.subr.mxu0 0.0
    %250 = vmatpush1.msra.mxu0 1.0
    %251 = vmatprep.subr.mxu0 0.0
    %252 = vmatpush1.msra.mxu0 1.0
    %253 = vmatprep.subr.mxu0 0.0
    %254 = vmatpush1.msra.mxu0 1.0
    %255 = vmatprep.subr.mxu0 0.0
    %256 = vmatpush1.msra.mxu0 1.0
    %257 = vmatprep.subr.mxu0 0.0
    %258 = vmatpush1.msra.mxu0 1.0
    %259 = vmatprep.subr.mxu0 0.0
    %260 = vmatpush1.msra.mxu0 1.0
    %261 = vmatprep.subr.mxu0 0.0
    %262 = vmatpush1.msra.mxu0 1.0
    %263 = vmatprep.subr.mxu0 0.0
    %264 = vmatpush1.msra.mxu0 1.0
    %265 = vmatprep.subr.mxu0 0.0
    %266 = vmatpush1.msra.mxu0 1.0
    %267 = vmatprep.subr.mxu0 0.0
    %268 = vmatpush1.msra.mxu0 1.0
    %269 = vmatprep.subr.mxu0 0.0
    %270 = vmatpush1.msra.mxu0 1.0
    %271 = vmatprep.subr.mxu0 0.0
    %272 = vmatpush1.msra.mxu0 1.0
    %273 = vmatprep.subr.mxu0 0.0
    %274 = vmatpush1.msra.mxu0 1.0
    %275 = vmatprep.subr.mxu0 0.0
    %276 = vmatpush1.msra.mxu0 1.0
    %277 = vmatprep.subr.mxu0 0.0
    %278 = vmatpush1.msra.mxu0 1.0
    %279 = vmatprep.subr.mxu0 0.0
    %280 = vmatpush1.msra.mxu0 1.0
    %281 = vmatprep.subr.mxu0 0.0
    %282 = vmatpush2.msra.mxu0 0.0
    %283 = vmatprep.subr.mxu0 0.0
    %284 = vmatpush2.msra.mxu0 0.0
    %285 = vmatprep.subr.mxu0 0.0
    %286 = vmatpush2.msra.mxu0 0.0
    %287 = vmatprep.subr.mxu0 0.0
    %288 = vmatpush2.msra.mxu0 0.0
    %289 = vmatprep.subr.mxu0 0.0
    %290 = vmatpush2.msra.mxu0 0.0
    %291 = vmatprep.subr.mxu0 0.0
    %292 = vmatpush2.msra.mxu0 0.0
    %293 = vmatprep.subr.mxu0 0.0
    %294 = vmatpush2.msra.mxu0 0.0
    %295 = vmatprep.subr.mxu0 0.0
    %296 = vmatpush2.msra.mxu0 0.0
    %297 = vmatprep.subr.mxu0 0.0
    %298 = vmatpush2.msra.mxu0 0.0
    %299 = vmatprep.subr.mxu0 0.0
    %300 = vmatpush2.msra.mxu0 0.0
    %301 = vmatprep.subr.mxu0 0.0
    %302 = vmatpush2.msra.mxu0 0.0
    %303 = vmatprep.subr.mxu0 0.0
    %304 = vmatpush2.msra.mxu0 0.0
    %305 = vmatprep.subr.mxu0 0.0
    %306 = vmatpush2.msra.mxu0 0.0
    %307 = vmatprep.subr.mxu0 0.0
    %308 = vmatpush2.msra.mxu0 0.0
    %309 = vmatprep.subr.mxu0 0.0
    %310 = vmatpush2.msra.mxu0 0.0
    %311 = vmatprep.subr.mxu0 0.0
    %312 = vmatpush2.msra.mxu0 0.0
    %313 = vmatprep.mubr.f32.mxu0 0.0
    %314 = vmatmul.mubr.f32.gmra.mxu0 %v233
    %v315 = vpop.f32.mrf.mxu0
    %v316 = vadd.f32 0.0, %v315
    %v317 = vpop.f32.mrf.mxu0
    %318 = vmatprep.mubr.f32.mxu0 0.0
    %319 = vmatmul.mubr.f32.gmra.mxu0 %v234
    %v320 = vpop.f32.mrf.mxu0
    %v321 = vadd.f32 0.0, %v320
    %v322 = vpop.f32.mrf.mxu0
    %323 = vmatprep.mubr.f32.mxu0 0.0
    %324 = vmatmul.mubr.f32.gmra.mxu0 %v235
    %v325 = vpop.f32.mrf.mxu0
    %v326 = vadd.f32 0.0, %v325
    %v327 = vpop.f32.mrf.mxu0
    %328 = vmatprep.mubr.f32.mxu0 0.0
    %329 = vmatmul.mubr.f32.gmra.mxu0 %v236
    %v330 = vpop.f32.mrf.mxu0
    %v331 = vadd.f32 0.0, %v330
    %v332 = vpop.f32.mrf.mxu0
    %333 = vmatprep.mubr.f32.mxu0 0.0
    %334 = vmatmul.mubr.f32.gmra.mxu0 %v237
    %v335 = vpop.f32.mrf.mxu0
    %v336 = vadd.f32 0.0, %v335
    %v337 = vpop.f32.mrf.mxu0
    %338 = vmatprep.mubr.f32.mxu0 0.0
    %339 = vmatmul.mubr.f32.gmra.mxu0 %v238
    %v340 = vpop.f32.mrf.mxu0
    %v341 = vadd.f32 0.0, %v340
    %v342 = vpop.f32.mrf.mxu0
    %343 = vmatprep.mubr.f32.mxu0 0.0
    %344 = vmatmul.mubr.f32.gmra.mxu0 %v239
    %v345 = vpop.f32.mrf.mxu0
    %v346 = vadd.f32 0.0, %v345
    %v347 = vpop.f32.mrf.mxu0
    %348 = vmatprep.mubr.f32.mxu0 0.0
    %349 = vmatmul.mubr.f32.gmra.mxu0 %v240
    %v350 = vpop.f32.mrf.mxu0
    %v351 = vadd.f32 0.0, %v350
    %v352 = vpop.f32.mrf.mxu0
    %353 = vmatprep.mubr.f32.mxu0 0.0
    %354 = vmatmul.mubr.f32.gmra.mxu0 %v241
    %v355 = vpop.f32.mrf.mxu0
    %v356 = vadd.f32 0.0, %v355
    %v357 = vpop.f32.mrf.mxu0
    %358 = vmatprep.mubr.f32.mxu0 0.0
    %359 = vmatmul.mubr.f32.gmra.mxu0 %v242
    %v360 = vpop.f32.mrf.mxu0
    %v361 = vadd.f32 0.0, %v360
    %v362 = vpop.f32.mrf.mxu0
    %363 = vmatprep.mubr.f32.mxu0 0.0
    %364 = vmatmul.mubr.f32.gmra.mxu0 %v243
    %v365 = vpop.f32.mrf.mxu0
    %v366 = vadd.f32 0.0, %v365
    %v367 = vpop.f32.mrf.mxu0
    %368 = vmatprep.mubr.f32.mxu0 0.0
    %369 = vmatmul.mubr.f32.gmra.mxu0 %v244
    %v370 = vpop.f32.mrf.mxu0
    %v371 = vadd.f32 0.0, %v370
    %v372 = vpop.f32.mrf.mxu0
    %373 = vmatprep.mubr.f32.mxu0 0.0
    %374 = vmatmul.mubr.f32.gmra.mxu0 %v245
    %v375 = vpop.f32.mrf.mxu0
    %v376 = vadd.f32 0.0, %v375
    %v377 = vpop.f32.mrf.mxu0
    %378 = vmatprep.mubr.f32.mxu0 0.0
    %379 = vmatmul.mubr.f32.gmra.mxu0 %v246
    %v380 = vpop.f32.mrf.mxu0
    %v381 = vadd.f32 0.0, %v380
    %v382 = vpop.f32.mrf.mxu0
    %383 = vmatprep.mubr.f32.mxu0 0.0
    %384 = vmatmul.mubr.f32.gmra.mxu0 %v247
    %v385 = vpop.f32.mrf.mxu0
    %v386 = vadd.f32 0.0, %v385
    %v387 = vpop.f32.mrf.mxu0
    %388 = vmatprep.mubr.f32.mxu0 0.0
    %389 = vmatmul.mubr.f32.gmra.mxu0 %v248
    %v390 = vpop.f32.mrf.mxu0
    %v391 = vadd.f32 0.0, %v390
    %v392 = vpop.f32.mrf.mxu0
    %393 = vdwg.mxu0
    %v394 = vmul.f32 %v56, %v56
    %v395 = vmul.f32 %v57, %v57
    %v396 = vmul.f32 %v58, %v58
    %v397 = vmul.f32 %v59, %v59
    %v398 = vmul.f32 %v60, %v60
    %v399 = vmul.f32 %v61, %v61
    %v400 = vmul.f32 %v62, %v62
    %v401 = vmul.f32 %v63, %v63
    %v402 = vmul.f32 %v64, %v64
    %v403 = vmul.f32 %v65, %v65
    %v404 = vmul.f32 %v66, %v66
    %v405 = vmul.f32 %v67, %v67
    %v406 = vmul.f32 %v68, %v68
    %v407 = vmul.f32 %v69, %v69
    %v408 = vmul.f32 %v70, %v70
    %v409 = vmul.f32 %v71, %v71
    %410 = vmatprep.subr.mxu0 0.0
    %411 = vmatpush1.msra.mxu0 1.0
    %412 = vmatprep.subr.mxu0 0.0
    %413 = vmatpush1.msra.mxu0 1.0
    %414 = vmatprep.subr.mxu0 0.0
    %415 = vmatpush1.msra.mxu0 1.0
    %416 = vmatprep.subr.mxu0 0.0
    %417 = vmatpush1.msra.mxu0 1.0
    %418 = vmatprep.subr.mxu0 0.0
    %419 = vmatpush1.msra.mxu0 1.0
    %420 = vmatprep.subr.mxu0 0.0
    %421 = vmatpush1.msra.mxu0 1.0
    %422 = vmatprep.subr.mxu0 0.0
    %423 = vmatpush1.msra.mxu0 1.0
    %424 = vmatprep.subr.mxu0 0.0
    %425 = vmatpush1.msra.mxu0 1.0
    %426 = vmatprep.subr.mxu0 0.0
    %427 = vmatpush1.msra.mxu0 1.0
    %428 = vmatprep.subr.mxu0 0.0
    %429 = vmatpush1.msra.mxu0 1.0
    %430 = vmatprep.subr.mxu0 0.0
    %431 = vmatpush1.msra.mxu0 1.0
    %432 = vmatprep.subr.mxu0 0.0
    %433 = vmatpush1.msra.mxu0 1.0
    %434 = vmatprep.subr.mxu0 0.0
    %435 = vmatpush1.msra.mxu0 1.0
    %436 = vmatprep.subr.mxu0 0.0
    %437 = vmatpush1.msra.mxu0 1.0
    %438 = vmatprep.subr.mxu0 0.0
    %439 = vmatpush1.msra.mxu0 1.0
    %440 = vmatprep.subr.mxu0 0.0
    %441 = vmatpush1.msra.mxu0 1.0
    %442 = vmatprep.subr.mxu0 0.0
    %443 = vmatpush2.msra.mxu0 0.0
    %444 = vmatprep.subr.mxu0 0.0
    %445 = vmatpush2.msra.mxu0 0.0
    %446 = vmatprep.subr.mxu0 0.0
    %447 = vmatpush2.msra.mxu0 0.0
    %448 = vmatprep.subr.mxu0 0.0
    %449 = vmatpush2.msra.mxu0 0.0
    %450 = vmatprep.subr.mxu0 0.0
    %451 = vmatpush2.msra.mxu0 0.0
    %452 = vmatprep.subr.mxu0 0.0
    %453 = vmatpush2.msra.mxu0 0.0
    %454 = vmatprep.subr.mxu0 0.0
    %455 = vmatpush2.msra.mxu0 0.0
    %456 = vmatprep.subr.mxu0 0.0
    %457 = vmatpush2.msra.mxu0 0.0
    %458 = vmatprep.subr.mxu0 0.0
    %459 = vmatpush2.msra.mxu0 0.0
    %460 = vmatprep.subr.mxu0 0.0
    %461 = vmatpush2.msra.mxu0 0.0
    %462 = vmatprep.subr.mxu0 0.0
    %463 = vmatpush2.msra.mxu0 0.0
    %464 = vmatprep.subr.mxu0 0.0
    %465 = vmatpush2.msra.mxu0 0.0
    %466 = vmatprep.subr.mxu0 0.0
    %467 = vmatpush2.msra.mxu0 0.0
    %468 = vmatprep.subr.mxu0 0.0
    %469 = vmatpush2.msra.mxu0 0.0
    %470 = vmatprep.subr.mxu0 0.0
    %471 = vmatpush2.msra.mxu0 0.0
    %472 = vmatprep.subr.mxu0 0.0
    %473 = vmatpush2.msra.mxu0 0.0
    %474 = vmatprep.mubr.f32.mxu0 0.0
    %475 = vmatmul.mubr.f32.gmra.mxu0 %v394
    %v476 = vpop.f32.mrf.mxu0
    %v477 = vadd.f32 0.0, %v476
    %v478 = vpop.f32.mrf.mxu0
    %479 = vmatprep.mubr.f32.mxu0 0.0
    %480 = vmatmul.mubr.f32.gmra.mxu0 %v395
    %v481 = vpop.f32.mrf.mxu0
    %v482 = vadd.f32 0.0, %v481
    %v483 = vpop.f32.mrf.mxu0
    %484 = vmatprep.mubr.f32.mxu0 0.0
    %485 = vmatmul.mubr.f32.gmra.mxu0 %v396
    %v486 = vpop.f32.mrf.mxu0
    %v487 = vadd.f32 0.0, %v486
    %v488 = vpop.f32.mrf.mxu0
    %489 = vmatprep.mubr.f32.mxu0 0.0
    %490 = vmatmul.mubr.f32.gmra.mxu0 %v397
    %v491 = vpop.f32.mrf.mxu0
    %v492 = vadd.f32 0.0, %v491
    %v493 = vpop.f32.mrf.mxu0
    %494 = vmatprep.mubr.f32.mxu0 0.0
    %495 = vmatmul.mubr.f32.gmra.mxu0 %v398
    %v496 = vpop.f32.mrf.mxu0
    %v497 = vadd.f32 0.0, %v496
    %v498 = vpop.f32.mrf.mxu0
    %499 = vmatprep.mubr.f32.mxu0 0.0
    %500 = vmatmul.mubr.f32.gmra.mxu0 %v399
    %v501 = vpop.f32.mrf.mxu0
    %v502 = vadd.f32 0.0, %v501
    %v503 = vpop.f32.mrf.mxu0
    %504 = vmatprep.mubr.f32.mxu0 0.0
    %505 = vmatmul.mubr.f32.gmra.mxu0 %v400
    %v506 = vpop.f32.mrf.mxu0
    %v507 = vadd.f32 0.0, %v506
    %v508 = vpop.f32.mrf.mxu0
    %509 = vmatprep.mubr.f32.mxu0 0.0
    %510 = vmatmul.mubr.f32.gmra.mxu0 %v401
    %v511 = vpop.f32.mrf.mxu0
    %v512 = vadd.f32 0.0, %v511
    %v513 = vpop.f32.mrf.mxu0
    %514 = vmatprep.mubr.f32.mxu0 0.0
    %515 = vmatmul.mubr.f32.gmra.mxu0 %v402
    %v516 = vpop.f32.mrf.mxu0
    %v517 = vadd.f32 0.0, %v516
    %v518 = vpop.f32.mrf.mxu0
    %519 = vmatprep.mubr.f32.mxu0 0.0
    %520 = vmatmul.mubr.f32.gmra.mxu0 %v403
    %v521 = vpop.f32.mrf.mxu0
    %v522 = vadd.f32 0.0, %v521
    %v523 = vpop.f32.mrf.mxu0
    %524 = vmatprep.mubr.f32.mxu0 0.0
    %525 = vmatmul.mubr.f32.gmra.mxu0 %v404
    %v526 = vpop.f32.mrf.mxu0
    %v527 = vadd.f32 0.0, %v526
    %v528 = vpop.f32.mrf.mxu0
    %529 = vmatprep.mubr.f32.mxu0 0.0
    %530 = vmatmul.mubr.f32.gmra.mxu0 %v405
    %v531 = vpop.f32.mrf.mxu0
    %v532 = vadd.f32 0.0, %v531
    %v533 = vpop.f32.mrf.mxu0
    %534 = vmatprep.mubr.f32.mxu0 0.0
    %535 = vmatmul.mubr.f32.gmra.mxu0 %v406
    %v536 = vpop.f32.mrf.mxu0
    %v537 = vadd.f32 0.0, %v536
    %v538 = vpop.f32.mrf.mxu0
    %539 = vmatprep.mubr.f32.mxu0 0.0
    %540 = vmatmul.mubr.f32.gmra.mxu0 %v407
    %v541 = vpop.f32.mrf.mxu0
    %v542 = vadd.f32 0.0, %v541
    %v543 = vpop.f32.mrf.mxu0
    %544 = vmatprep.mubr.f32.mxu0 0.0
    %545 = vmatmul.mubr.f32.gmra.mxu0 %v408
    %v546 = vpop.f32.mrf.mxu0
    %v547 = vadd.f32 0.0, %v546
    %v548 = vpop.f32.mrf.mxu0
    %549 = vmatprep.mubr.f32.mxu0 0.0
    %550 = vmatmul.mubr.f32.gmra.mxu0 %v409
    %v551 = vpop.f32.mrf.mxu0
    %v552 = vadd.f32 0.0, %v551
    %v553 = vpop.f32.mrf.mxu0
    %554 = vdwg.mxu0
    %v555 = vmul.f32 %v316, %v477
    %v556 = vmul.f32 %v321, %v482
    %v557 = vmul.f32 %v326, %v487
    %v558 = vmul.f32 %v331, %v492
    %v559 = vmul.f32 %v336, %v497
    %v560 = vmul.f32 %v341, %v502
    %v561 = vmul.f32 %v346, %v507
    %v562 = vmul.f32 %v351, %v512
    %v563 = vmul.f32 %v356, %v517
    %v564 = vmul.f32 %v361, %v522
    %v565 = vmul.f32 %v366, %v527
    %v566 = vmul.f32 %v371, %v532
    %v567 = vmul.f32 %v376, %v537
    %v568 = vmul.f32 %v381, %v542
    %v569 = vmul.f32 %v386, %v547
    %v570 = vmul.f32 %v391, %v552
    %v571 = vmax.f32 %v555, 1e-16
    %v572 = vmax.f32 %v556, 1e-16
    %v573 = vmax.f32 %v557, 1e-16
    %v574 = vmax.f32 %v558, 1e-16
    %v575 = vmax.f32 %v559, 1e-16
    %v576 = vmax.f32 %v560, 1e-16
    %v577 = vmax.f32 %v561, 1e-16
    %v578 = vmax.f32 %v562, 1e-16
    %v579 = vmax.f32 %v563, 1e-16
    %v580 = vmax.f32 %v564, 1e-16
    %v581 = vmax.f32 %v565, 1e-16
    %v582 = vmax.f32 %v566, 1e-16
    %v583 = vmax.f32 %v567, 1e-16
    %v584 = vmax.f32 %v568, 1e-16
    %v585 = vmax.f32 %v569, 1e-16
    %v586 = vmax.f32 %v570, 1e-16
    %v587 = vrsqrt.pop %v571
    %v588 = vrsqrt.pop %v572
    %v589 = vrsqrt.pop %v573
    %v590 = vrsqrt.pop %v574
    %v591 = vrsqrt.pop %v575
    %v592 = vrsqrt.pop %v576
    %v593 = vrsqrt.pop %v577
    %v594 = vrsqrt.pop %v578
    %v595 = vrsqrt.pop %v579
    %v596 = vrsqrt.pop %v580
    %v597 = vrsqrt.pop %v581
    %v598 = vrsqrt.pop %v582
    %v599 = vrsqrt.pop %v583
    %v600 = vrsqrt.pop %v584
    %v601 = vrsqrt.pop %v585
    %v602 = vrsqrt.pop %v586
    %v603 = vmul.f32 %v155, %v587
    %v604 = vmul.f32 %v160, %v588
    %v605 = vmul.f32 %v165, %v589
    %v606 = vmul.f32 %v170, %v590
    %v607 = vmul.f32 %v175, %v591
    %v608 = vmul.f32 %v180, %v592
    %v609 = vmul.f32 %v185, %v593
    %v610 = vmul.f32 %v190, %v594
    %v611 = vmul.f32 %v195, %v595
    %v612 = vmul.f32 %v200, %v596
    %v613 = vmul.f32 %v205, %v597
    %v614 = vmul.f32 %v210, %v598
    %v615 = vmul.f32 %v215, %v599
    %v616 = vmul.f32 %v220, %v600
    %v617 = vmul.f32 %v225, %v601
    %v618 = vmul.f32 %v230, %v602
    %s619 = smul.u32 0, 128
    %v620 = vlaneseq
    %v621 = vand.u32 %v620, 127
    %v622 = vstv %s619
    %v623 = vadd.s32 %v622, %v621
    %vm624 = vcmp.lt.s32.totalorder %v623, 8
    %641 = vset.pattern.permute.xlu0 0
    %642 = vperm.xlu0 %641, %v603
    %v643 = vpop.permute.xlu0 %642
    %644 = vset.pattern.permute.xlu0 0
    %645 = vperm.xlu0 %644, %v604
    %v646 = vpop.permute.xlu0 %645
    %647 = vset.pattern.permute.xlu0 0
    %648 = vperm.xlu0 %647, %v605
    %v649 = vpop.permute.xlu0 %648
    %650 = vset.pattern.permute.xlu0 0
    %651 = vperm.xlu0 %650, %v606
    %v652 = vpop.permute.xlu0 %651
    %653 = vset.pattern.permute.xlu0 0
    %654 = vperm.xlu0 %653, %v607
    %v655 = vpop.permute.xlu0 %654
    %656 = vset.pattern.permute.xlu0 0
    %657 = vperm.xlu0 %656, %v608
    %v658 = vpop.permute.xlu0 %657
    %659 = vset.pattern.permute.xlu0 0
    %660 = vperm.xlu0 %659, %v609
    %v661 = vpop.permute.xlu0 %660
    %662 = vset.pattern.permute.xlu0 0
    %663 = vperm.xlu0 %662, %v610
    %v664 = vpop.permute.xlu0 %663
    %665 = vset.pattern.permute.xlu0 0
    %666 = vperm.xlu0 %665, %v611
    %v667 = vpop.permute.xlu0 %666
    %668 = vset.pattern.permute.xlu0 0
    %669 = vperm.xlu0 %668, %v612
    %v670 = vpop.permute.xlu0 %669
    %671 = vset.pattern.permute.xlu0 0
    %672 = vperm.xlu0 %671, %v613
    %v673 = vpop.permute.xlu0 %672
    %674 = vset.pattern.permute.xlu0 0
    %675 = vperm.xlu0 %674, %v614
    %v676 = vpop.permute.xlu0 %675
    %677 = vset.pattern.permute.xlu0 0
    %678 = vperm.xlu0 %677, %v615
    %v679 = vpop.permute.xlu0 %678
    %680 = vset.pattern.permute.xlu0 0
    %681 = vperm.xlu0 %680, %v616
    %v682 = vpop.permute.xlu0 %681
    %683 = vset.pattern.permute.xlu0 0
    %684 = vperm.xlu0 %683, %v617
    %v685 = vpop.permute.xlu0 %684
    %686 = vset.pattern.permute.xlu0 0
    %687 = vperm.xlu0 %686, %v618
    %v688 = vpop.permute.xlu0 %687
    %v689 = vlaneseq
    %v690 = vshrl.u32 %v689, 7
    %v691 = vsub.s32 %v621, %v690
    %v692 = vrot.slane %v643, %v691
    %v693 = vadd.s32 %v621, 4294967288
    %v694 = vlaneseq
    %v695 = vshrl.u32 %v694, 7
    %v696 = vsub.s32 %v693, %v695
    %v697 = vrot.slane %v646, %v696
    %vm698 = vcmask 130112
    %v699 = vsel %vm698, %v697, %v692
    %v700 = vadd.s32 %v621, 4294967280
    %v701 = vlaneseq
    %v702 = vshrl.u32 %v701, 7
    %v703 = vsub.s32 %v700, %v702
    %v704 = vrot.slane %v649, %v703
    %vm705 = vcmask 195712
    %v706 = vsel %vm705, %v704, %v699
    %v707 = vadd.s32 %v621, 4294967272
    %v708 = vlaneseq
    %v709 = vshrl.u32 %v708, 7
    %v710 = vsub.s32 %v707, %v709
    %v711 = vrot.slane %v652, %v710
    %vm712 = vcmask 261312
    %v713 = vsel %vm712, %v711, %v706
    %v714 = vadd.s32 %v621, 4294967264
    %v715 = vlaneseq
    %v716 = vshrl.u32 %v715, 7
    %v717 = vsub.s32 %v714, %v716
    %v718 = vrot.slane %v655, %v717
    %vm719 = vcmask 326912
    %v720 = vsel %vm719, %v718, %v713
    %v721 = vadd.s32 %v621, 4294967256
    %v722 = vlaneseq
    %v723 = vshrl.u32 %v722, 7
    %v724 = vsub.s32 %v721, %v723
    %v725 = vrot.slane %v658, %v724
    %vm726 = vcmask 392512
    %v727 = vsel %vm726, %v725, %v720
    %v728 = vadd.s32 %v621, 4294967248
    %v729 = vlaneseq
    %v730 = vshrl.u32 %v729, 7
    %v731 = vsub.s32 %v728, %v730
    %v732 = vrot.slane %v661, %v731
    %vm733 = vcmask 458112
    %v734 = vsel %vm733, %v732, %v727
    %v735 = vadd.s32 %v621, 4294967240
    %v736 = vlaneseq
    %v737 = vshrl.u32 %v736, 7
    %v738 = vsub.s32 %v735, %v737
    %v739 = vrot.slane %v664, %v738
    %vm740 = vcmask 523712
    %v741 = vsel %vm740, %v739, %v734
    %v742 = vadd.s32 %v621, 4294967232
    %v743 = vlaneseq
    %v744 = vshrl.u32 %v743, 7
    %v745 = vsub.s32 %v742, %v744
    %v746 = vrot.slane %v667, %v745
    %vm747 = vcmask 589312
    %v748 = vsel %vm747, %v746, %v741
    %v749 = vadd.s32 %v621, 4294967224
    %v750 = vlaneseq
    %v751 = vshrl.u32 %v750, 7
    %v752 = vsub.s32 %v749, %v751
    %v753 = vrot.slane %v670, %v752
    %vm754 = vcmask 654912
    %v755 = vsel %vm754, %v753, %v748
    %v756 = vadd.s32 %v621, 4294967216
    %v757 = vlaneseq
    %v758 = vshrl.u32 %v757, 7
    %v759 = vsub.s32 %v756, %v758
    %v760 = vrot.slane %v673, %v759
    %vm761 = vcmask 720512
    %v762 = vsel %vm761, %v760, %v755
    %v763 = vadd.s32 %v621, 4294967208
    %v764 = vlaneseq
    %v765 = vshrl.u32 %v764, 7
    %v766 = vsub.s32 %v763, %v765
    %v767 = vrot.slane %v676, %v766
    %vm768 = vcmask 786112
    %v769 = vsel %vm768, %v767, %v762
    %v770 = vadd.s32 %v621, 4294967200
    %v771 = vlaneseq
    %v772 = vshrl.u32 %v771, 7
    %v773 = vsub.s32 %v770, %v772
    %v774 = vrot.slane %v679, %v773
    %vm775 = vcmask 851712
    %v776 = vsel %vm775, %v774, %v769
    %v777 = vadd.s32 %v621, 4294967192
    %v778 = vlaneseq
    %v779 = vshrl.u32 %v778, 7
    %v780 = vsub.s32 %v777, %v779
    %v781 = vrot.slane %v682, %v780
    %vm782 = vcmask 917312
    %v783 = vsel %vm782, %v781, %v776
    %v784 = vadd.s32 %v621, 4294967184
    %v785 = vlaneseq
    %v786 = vshrl.u32 %v785, 7
    %v787 = vsub.s32 %v784, %v786
    %v788 = vrot.slane %v685, %v787
    %vm789 = vcmask 982912
    %v790 = vsel %vm789, %v788, %v783
    %v791 = vadd.s32 %v621, 4294967176
    %v792 = vlaneseq
    %v793 = vshrl.u32 %v792, 7
    %v794 = vsub.s32 %v791, %v793
    %v795 = vrot.slane %v688, %v794
    %vm796 = vcmask 1048512
    %v797 = vsel %vm796, %v795, %v790
    %v799 = vsel %vm624, %v797, 0.0
    %800 = vst [vmem:[#allocation7] sm:$0x1] %v799
    // Predicated region
    $region18: #{tpu_custom_call.1} parent=1 // pred_check
      _
    $region19: #{tpu_custom_call.1} parent=1 // pred_check_branch
      %802 = sbr.rel (0) target = $region21
    $region20: #{tpu_custom_call.1} parent=1 // pred_region
      %s804 = ssub.s32 16, 16
      %805 = vsyncadd [#allocation4], %s804
      %s807 = sshll.u32 [#allocation7], 4
      %s808 = int_to_ptr.vmem [resolvable:$true] %s807
      %810 = dma.vmem_to_hbm [thread:$0]  %s808, 16, %s2, [#allocation4]
    $region21: #{tpu_custom_call.1} parent=1 // pred_fallthru
      _
    // Predicated region
    $region22: #{tpu_custom_call.1} parent=1 // pred_check
      _
    $region23: #{tpu_custom_call.1} parent=1 // pred_check_branch
      %812 = sbr.rel (0) target = $region25
    $region24: #{tpu_custom_call.1} parent=1 // pred_region
      %813 = dma.done [#allocation4], 16
    $region25: #{tpu_custom_call.1} parent=1 // pred_fallthru
      _
    %814 = vsyncpa [#allocation3], 1
    %815 = vsyncpa [#allocation6], 1
    %816 = vsyncpa [#allocation4], 1

</llo_original>
